<compile_context>
chip_gen: v6e
topology: v6e:2x2x1
jax: 0.10.0
libtpu: 0.0.40
codegen_flags: <defaults>
</compile_context>

<pallas_src>
import functools

import jax
import jax.numpy as jnp
from jax import lax
from jax.experimental import pallas as pl
from jax.experimental.pallas import tpu as pltpu

LANES = 128
SUBLANES = 8
WIDE_ACC_ROWS = 64              # 8 independent add chains per lane
TARGET_BLOCK_BYTES = 2 << 20    # ~2 MiB of input bytes per block per buffer


def _round_up(x, m):
    return ((x + m - 1) // m) * m


def _detect_num_tensorcores():
    """Best-effort TensorCore count (2 on v7x, 1 on v5e/v6e); safe fallback 1."""
    try:
        info = pltpu.get_tpu_info()
    except Exception:
        return 1
    for name in ("num_cores", "core_count", "num_tensorcores", "tensorcore_count"):
        val = getattr(info, name, None)
        if isinstance(val, int) and val > 0:
            return val
    return 1


def _joint_loss_kernel(o_ref, t_ref, sq_ref, ab_ref, *,
                       tile_rows, acc_rows, inner_steps, nblocks, rows, needs_mask):
    """One streaming step of the fused MSE / L1 partial reduction.

    o_ref, t_ref : (tile_rows, 128) VMEM tiles of the flattened inputs.
    sq_ref       : (acc_rows, 128) resident accumulator for sum((o-t)^2), per shard.
    ab_ref       : (acc_rows, 128) resident accumulator for sum(|o-t|),   per shard.
    """
    s = pl.program_id(0)   # shard axis (maps to a TensorCore on multi-TC chips)
    i = pl.program_id(1)   # streaming / reduction axis

    @pl.when(i == 0)
    def _():
        sq_ref[...] = jnp.zeros_like(sq_ref)
        ab_ref[...] = jnp.zeros_like(ab_ref)

    diff = o_ref[...].astype(jnp.float32) - t_ref[...].astype(jnp.float32)

    def accumulate(d):
        # Fold the (tile_rows, 128) tile onto (acc_rows, 128) with pure VPU adds.
        sq_ref[...] += (d * d).reshape(-1, acc_rows, LANES).sum(axis=0)
        ab_ref[...] += jnp.abs(d).reshape(-1, acc_rows, LANES).sum(axis=0)

    if needs_mask:
        block = s * inner_steps + i   # logical (unclamped) block index

        @pl.when(block >= nblocks - 1)
        def _():
            # Tail tile (possibly partial) and redundant clamped tiles only.
            # Mask `diff` BEFORE square/abs so garbage block padding can never
            # leak through the reduction (jnp.where selects 0.0 exactly).
            row0 = block * tile_rows
            r = lax.broadcasted_iota(jnp.int32, (tile_rows, LANES), 0)
            accumulate(jnp.where(row0 + r < rows, diff, jnp.float32(0.0)))

        @pl.when(block < nblocks - 1)
        def _():
            accumulate(diff)
    else:
        accumulate(diff)


def joint_loss(outputs, targets, weights=(0.7, 0.3), tile_rows=None, num_shards=None):
    """JointLoss(MSELoss(), L1Loss(), weights=weights)(outputs, targets)."""
    assert outputs.shape == targets.shape
    n_elems = outputs.size
    w0 = jnp.float32(weights[0])
    w1 = jnp.float32(weights[1])

    o_flat = outputs.reshape(-1)
    t_flat = targets.reshape(-1)

    # Sub-row (lane) tail: instead of jnp.pad-ing BOTH tensors (an extra full
    # HBM read+write pass), the <128-element remainder is reduced in plain JAX
    # and the kernel streams the 128-aligned prefix.
    rem = n_elems % LANES
    main = n_elems - rem
    if rem:
        dt = o_flat[main:].astype(jnp.float32) - t_flat[main:].astype(jnp.float32)
        tail_sq = jnp.sum(dt * dt)
        tail_ab = jnp.sum(jnp.abs(dt))
        o_flat = o_flat[:main]
        t_flat = t_flat[:main]
    else:
        tail_sq = jnp.float32(0.0)
        tail_ab = jnp.float32(0.0)

    inv_n = jnp.float32(1.0 / n_elems)
    if main == 0:
        # Tiny input (< 128 elements): nothing left for the kernel.
        return w0 * (tail_sq * inv_n) + w1 * (tail_ab * inv_n)

    rows = main // LANES
    o2 = o_flat.reshape(rows, LANES)
    t2 = t_flat.reshape(rows, LANES)

    # Block plan: ~2 MiB of DMA bytes per input block (so bf16 inputs stream
    # twice the rows of f32), clamped down for small inputs.
    if tile_rows is None:
        itemsize = jnp.dtype(outputs.dtype).itemsize
        tile_rows = max(SUBLANES, TARGET_BLOCK_BYTES // (LANES * itemsize))
    tile_rows = int(tile_rows)
    tile_rows = min(tile_rows, _round_up(rows, SUBLANES))
    tile_rows = max(SUBLANES, _round_up(tile_rows, SUBLANES))
    acc_rows = WIDE_ACC_ROWS if tile_rows % WIDE_ACC_ROWS == 0 else SUBLANES

    nblocks = pl.cdiv(rows, tile_rows)
    if num_shards is None:
        num_shards = _detect_num_tensorcores()
    num_shards = max(1, min(int(num_shards), nblocks))
    inner_steps = pl.cdiv(nblocks, num_shards)
    total_blocks = num_shards * inner_steps
    needs_mask = (total_blocks * tile_rows) != rows

    if total_blocks > nblocks:
        # Redundant trailing steps of the last shard re-read the final valid
        # block; the in-kernel mask zeroes their contribution.
        def in_map(s, i):
            return (jnp.minimum(s * inner_steps + i, nblocks - 1), 0)
    else:
        def in_map(s, i):
            return (s * inner_steps + i, 0)

    kernel = functools.partial(
        _joint_loss_kernel,
        tile_rows=tile_rows,
        acc_rows=acc_rows,
        inner_steps=inner_steps,
        nblocks=nblocks,
        rows=rows,
        needs_mask=needs_mask,
    )

    part_spec = pl.BlockSpec((None, acc_rows, LANES), lambda s, i: (s, 0, 0))
    sq_part, ab_part = pl.pallas_call(
        kernel,
        out_shape=(
            jax.ShapeDtypeStruct((num_shards, acc_rows, LANES), jnp.float32),
            jax.ShapeDtypeStruct((num_shards, acc_rows, LANES), jnp.float32),
        ),
        grid_spec=pltpu.PrefetchScalarGridSpec(
            num_scalar_prefetch=0,
            grid=(num_shards, inner_steps),
            in_specs=[
                pl.BlockSpec((tile_rows, LANES), in_map),
                pl.BlockSpec((tile_rows, LANES), in_map),
            ],
            out_specs=(part_spec, part_spec),
        ),
        # "parallel" on the shard axis -> megacore split across TensorCores on
        # multi-TC chips (v7x); harmless serial loop on single-TC chips.
        compiler_params=pltpu.CompilerParams(
            dimension_semantics=("parallel", "arbitrary"),
        ),
    )(o2, t2)

    # Tiny final combine (a few KiB of partials) in plain JAX.
    mse = (jnp.sum(sq_part) + tail_sq) * inv_n
    mae = (jnp.sum(ab_part) + tail_ab) * inv_n
    return w0 * mse + w1 * mae


def joint_loss_ref(outputs, targets, weights=(0.7, 0.3)):
    o = outputs.astype(jnp.float32)
    t = targets.astype(jnp.float32)
    mse = jnp.mean((o - t) ** 2)
    mae = jnp.mean(jnp.abs(o - t))
    return weights[0] * mse + weights[1] * mae


if __name__ == "__main__":
    key = jax.random.PRNGKey(0)
    k1, k2, k3, k4, k5, k6, k7, k8 = jax.random.split(key, 8)

    # 1) NCHW inputs, lane-aligned, single block, default plan.
    o1 = jax.random.normal(k1, (2, 4, 16, 16), dtype=jnp.float32)
    t1 = jax.random.normal(k2, (2, 4, 16, 16), dtype=jnp.float32)
    loss1 = jax.block_until_ready(joint_loss(o1, t1, weights=(0.7, 0.3)))
    ref1 = joint_loss_ref(o1, t1, weights=(0.7, 0.3))
    assert jnp.allclose(loss1, ref1, rtol=1e-5, atol=1e-5), (loss1, ref1)

    # 2) Ragged everything: lane tail (plain-JAX remainder), partial last row
    #    block, 2 shards with a redundant clamped trailing step.
    o2 = jax.random.normal(k3, (3, 5, 17, 19), dtype=jnp.float32)
    t2 = jax.random.normal(k4, (3, 5, 17, 19), dtype=jnp.float32)
    loss2 = jax.block_until_ready(
        joint_loss(o2, t2, weights=(0.7, 0.3), tile_rows=8, num_shards=2))
    ref2 = joint_loss_ref(o2, t2, weights=(0.7, 0.3))
    assert jnp.allclose(loss2, ref2, rtol=1e-5, atol=1e-5), (loss2, ref2)

    # 3) bf16 inputs, multi-block streaming path with wide (64,128) accumulators.
    o3 = jax.random.normal(k5, (4, 8, 32, 32), dtype=jnp.bfloat16)
    t3 = jax.random.normal(k6, (4, 8, 32, 32), dtype=jnp.bfloat16)
    loss3 = jax.block_until_ready(
        joint_loss(o3, t3, weights=(0.7, 0.3), tile_rows=64, num_shards=1))
    ref3 = joint_loss_ref(o3, t3, weights=(0.7, 0.3))
    assert jnp.allclose(loss3, ref3, rtol=1e-4, atol=1e-5), (loss3, ref3)

    # 4) Sub-128-element input: pure-JAX fallback path.
    o4 = jax.random.normal(k7, (3, 5), dtype=jnp.float32)
    t4 = jax.random.normal(k8, (3, 5), dtype=jnp.float32)
    loss4 = jax.block_until_ready(joint_loss(o4, t4, weights=(0.7, 0.3)))
    ref4 = joint_loss_ref(o4, t4, weights=(0.7, 0.3))
    assert jnp.allclose(loss4, ref4, rtol=1e-5, atol=1e-5), (loss4, ref4)

    print("KERNEL_OK")
</pallas_src>

<mosaic_0001>
module attributes {stable_mosaic.version = 11 : i64} {
  func.func @_joint_loss_kernel(%arg0: i32, %arg1: i32, %arg2: memref<16x128xf32, #tpu.memory_space<vmem>>, %arg3: memref<16x128xf32, #tpu.memory_space<vmem>>, %arg4: memref<1x8x128xf32, #tpu.memory_space<vmem>>, %arg5: memref<1x8x128xf32, #tpu.memory_space<vmem>>) attributes {dimension_semantics = [#tpu.dimension_semantics<parallel>, #tpu.dimension_semantics<arbitrary>], iteration_bounds = array<i64: 1, 1>, scalar_prefetch = 0 : i64, scratch_operands = 0 : i64, tpu.core_type = #tpu.core_type<tc>, window_params = [{transform_indices = @transform_0, window_bounds = array<i64: 16, 128>}, {transform_indices = @transform_1, window_bounds = array<i64: 16, 128>}, {transform_indices = @transform_2, window_bounds = array<i64: 1, 8, 128>}, {transform_indices = @transform_3, window_bounds = array<i64: 1, 8, 128>}]} {
    %c0_i32 = arith.constant 0 : i32
    %0 = arith.cmpi eq, %arg1, %c0_i32 : i32
    %1 = arith.extui %0 : i1 to i32
    %c0_i32_0 = arith.constant 0 : i32
    %2 = arith.cmpi ne, %1, %c0_i32_0 : i32
    scf.if %2 {
      %cst_17 = arith.constant 0.000000e+00 : f32
      %24 = vector.broadcast %cst_17 : f32 to vector<8x128xf32>
      %c0_18 = arith.constant 0 : index
      %c0_19 = arith.constant 0 : index
      %c0_20 = arith.constant 0 : index
      %25 = vector.load %arg4[%c0_18, %c0_19, %c0_20] : memref<1x8x128xf32, #tpu.memory_space<vmem>>, vector<1x8x128xf32>
      %26 = vector.shape_cast %25 : vector<1x8x128xf32> to vector<8x128xf32>
      %27 = vector.shape_cast %24 : vector<8x128xf32> to vector<1x8x128xf32>
      tpu.vector_store %arg4[%c0_18, %c0_19, %c0_20], %27 {strides = array<i32>} : memref<1x8x128xf32, #tpu.memory_space<vmem>>, vector<1x8x128xf32>,
      %cst_21 = arith.constant 0.000000e+00 : f32
      %28 = vector.broadcast %cst_21 : f32 to vector<8x128xf32>
      %c0_22 = arith.constant 0 : index
      %c0_23 = arith.constant 0 : index
      %c0_24 = arith.constant 0 : index
      %29 = vector.load %arg5[%c0_22, %c0_23, %c0_24] : memref<1x8x128xf32, #tpu.memory_space<vmem>>, vector<1x8x128xf32>
      %30 = vector.shape_cast %29 : vector<1x8x128xf32> to vector<8x128xf32>
      %31 = vector.shape_cast %28 : vector<8x128xf32> to vector<1x8x128xf32>
      tpu.vector_store %arg5[%c0_22, %c0_23, %c0_24], %31 {strides = array<i32>} : memref<1x8x128xf32, #tpu.memory_space<vmem>>, vector<1x8x128xf32>,
    } else {
    }
    %c0 = arith.constant 0 : index
    %c0_1 = arith.constant 0 : index
    %3 = vector.load %arg2[%c0, %c0_1] : memref<16x128xf32, #tpu.memory_space<vmem>>, vector<16x128xf32>
    %c0_2 = arith.constant 0 : index
    %c0_3 = arith.constant 0 : index
    %4 = vector.load %arg3[%c0_2, %c0_3] : memref<16x128xf32, #tpu.memory_space<vmem>>, vector<16x128xf32>
    %5 = arith.subf %3, %4 : vector<16x128xf32>
    %c0_4 = arith.constant 0 : index
    %c0_5 = arith.constant 0 : index
    %c0_6 = arith.constant 0 : index
    %6 = vector.load %arg4[%c0_4, %c0_5, %c0_6] : memref<1x8x128xf32, #tpu.memory_space<vmem>>, vector<1x8x128xf32>
    %7 = vector.shape_cast %6 : vector<1x8x128xf32> to vector<8x128xf32>
    %8 = arith.mulf %5, %5 : vector<16x128xf32>
    %9 = vector.shape_cast %8 : vector<16x128xf32> to vector<2x8x128xf32>
    %cst = arith.constant dense<0.000000e+00> : vector<8x128xf32>
    %10 = vector.multi_reduction <add>, %9, %cst [0] : vector<2x8x128xf32> to vector<8x128xf32>
    %11 = arith.addf %7, %10 : vector<8x128xf32>
    %c0_7 = arith.constant 0 : index
    %c0_8 = arith.constant 0 : index
    %c0_9 = arith.constant 0 : index
    %12 = vector.load %arg4[%c0_7, %c0_8, %c0_9] : memref<1x8x128xf32, #tpu.memory_space<vmem>>, vector<1x8x128xf32>
    %13 = vector.shape_cast %12 : vector<1x8x128xf32> to vector<8x128xf32>
    %14 = vector.shape_cast %11 : vector<8x128xf32> to vector<1x8x128xf32>
    tpu.vector_store %arg4[%c0_7, %c0_8, %c0_9], %14 {strides = array<i32>} : memref<1x8x128xf32, #tpu.memory_space<vmem>>, vector<1x8x128xf32>,
    %c0_10 = arith.constant 0 : index
    %c0_11 = arith.constant 0 : index
    %c0_12 = arith.constant 0 : index
    %15 = vector.load %arg5[%c0_10, %c0_11, %c0_12] : memref<1x8x128xf32, #tpu.memory_space<vmem>>, vector<1x8x128xf32>
    %16 = vector.shape_cast %15 : vector<1x8x128xf32> to vector<8x128xf32>
    %17 = math.absf %5 : vector<16x128xf32>
    %18 = vector.shape_cast %17 : vector<16x128xf32> to vector<2x8x128xf32>
    %cst_13 = arith.constant dense<0.000000e+00> : vector<8x128xf32>
    %19 = vector.multi_reduction <add>, %18, %cst_13 [0] : vector<2x8x128xf32> to vector<8x128xf32>
    %20 = arith.addf %16, %19 : vector<8x128xf32>
    %c0_14 = arith.constant 0 : index
    %c0_15 = arith.constant 0 : index
    %c0_16 = arith.constant 0 : index
    %21 = vector.load %arg5[%c0_14, %c0_15, %c0_16] : memref<1x8x128xf32, #tpu.memory_space<vmem>>, vector<1x8x128xf32>
    %22 = vector.shape_cast %21 : vector<1x8x128xf32> to vector<8x128xf32>
    %23 = vector.shape_cast %20 : vector<8x128xf32> to vector<1x8x128xf32>
    tpu.vector_store %arg5[%c0_14, %c0_15, %c0_16], %23 {strides = array<i32>} : memref<1x8x128xf32, #tpu.memory_space<vmem>>, vector<1x8x128xf32>,
    return
  }
  func.func @transform_0(%arg0: i32, %arg1: i32) -> (i32, i32) {
    %c1_i32 = arith.constant 1 : i32
    %0 = arith.muli %arg0, %c1_i32 : i32
    %1 = arith.addi %0, %arg1 : i32
    %c0_i32 = arith.constant 0 : i32
    %c0_i32_0 = arith.constant 0 : i32
    return %1, %c0_i32 : i32, i32
  }
  func.func @transform_1(%arg0: i32, %arg1: i32) -> (i32, i32) {
    %c1_i32 = arith.constant 1 : i32
    %0 = arith.muli %arg0, %c1_i32 : i32
    %1 = arith.addi %0, %arg1 : i32
    %c0_i32 = arith.constant 0 : i32
    %c0_i32_0 = arith.constant 0 : i32
    return %1, %c0_i32 : i32, i32
  }
  func.func @transform_2(%arg0: i32, %arg1: i32) -> (i32, i32, i32) {
    %c0_i32 = arith.constant 0 : i32
    %c0_i32_0 = arith.constant 0 : i32
    %c0_i32_1 = arith.constant 0 : i32
    return %arg0, %c0_i32, %c0_i32_0 : i32, i32, i32
  }
  func.func @transform_3(%arg0: i32, %arg1: i32) -> (i32, i32, i32) {
    %c0_i32 = arith.constant 0 : i32
    %c0_i32_0 = arith.constant 0 : i32
    %c0_i32_1 = arith.constant 0 : i32
    return %arg0, %c0_i32, %c0_i32_0 : i32, i32, i32
  }
}

</mosaic_0001>

<llo_original>
// kernel: tpu_custom_call.1
$region0: #{tpu_custom_call.1}
  #allocation0 [shape = 'u32[]', space=smem, size = 0x4, offset = 0x4, fixed_abs, tag = 'smem constant byte address 0x4 - core index']
  #allocation1 [shape = 'u32[144,128]{1,0:T(1,128)}', space=vmem, size = 0x12000, scoped, tag = 'internal scratch']
  %s0 = inlined_call_operand.hbm [shape: f32[16,128], index: 0, kind: input, shape index: {}]
  %s1 = inlined_call_operand.hbm [shape: f32[16,128], index: 1, kind: input, shape index: {}]
  %s2 = inlined_call_operand.hbm [shape: f32[1,8,128], index: 2, kind: output, shape index: {0}]
  %s3 = inlined_call_operand.hbm [shape: f32[1,8,128], index: 3, kind: output, shape index: {1}]
  %4 = xla_tuple %s2, %s3
  %s5 = sld [smem:[#allocation0]]
  $region38: #{tpu_custom_call.1} parent=0
    _
  %s7 = ssub.s32 1, %s5
  %s8 = scalar_select 0, %s7, %s5
  $region1: #{tpu_custom_call.1} parent=0
    #allocation2 [shape = 'u8[8192]{0}', space=vmem, size = 0x2000, scoped, tag = 'input window, operand 0, single buffered']
    #allocation3 [shape = 's32[1]{0}', space=sflag, size = 0x4, scoped, tag = 'scoped memory for tpu_custom_call.1']
    #allocation4 [shape = 's32[1]{0}', space=sflag, size = 0x4, scoped, tag = 'scoped memory for tpu_custom_call.1']
    #allocation5 [shape = 'u8[8192]{0}', space=vmem, size = 0x2000, scoped, tag = 'input window, operand 1, single buffered']
    #allocation6 [shape = 's32[1]{0}', space=sflag, size = 0x4, scoped, tag = 'scoped memory for tpu_custom_call.1']
    #allocation7 [shape = 'u8[4096]{0}', space=vmem, size = 0x1000, scoped, tag = 'output window, operand 0, single buffered']
    #allocation8 [shape = 'u8[4096]{0}', space=vmem, size = 0x1000, scoped, tag = 'output window, operand 1, single buffered']
    #allocation9 [shape = 's32[1]{0}', space=sflag, size = 0x4, scoped, tag = 'scoped memory for tpu_custom_call.1']
    %9 = vsyncpa [#allocation3], 0
    %10 = vsyncpa [#allocation6], 0
    %11 = vsyncpa [#allocation4], 0
    %12 = vsyncpa [#allocation9], 0
    // Predicated region
    $region2: #{tpu_custom_call.1} parent=1 // pred_check
      _
    $region3: #{tpu_custom_call.1} parent=1 // pred_check_branch
      %14 = sbr.rel (0) target = $region5
    $region4: #{tpu_custom_call.1} parent=1 // pred_region
      %s15 = sadd.s32 0, 0
      %s16 = smul.u32 2, %s15
      %s18 = ssub.s32 256, 256
      %19 = vsyncadd [#allocation3], %s18
      %s20 = smul.addr %s16, 128
      %s21 = scalar_lea.hbm %s0, %s20
      %s22 = sshll.u32 [#allocation2], 4
      %s23 = int_to_ptr.vmem [resolvable:$true] %s22
      %28 = dma.hbm_to_vmem [thread:$0]  %s21, 256, %s23, [#allocation3], 128, 128, 8
    $region5: #{tpu_custom_call.1} parent=1 // pred_fallthru
      _
    // Predicated region
    $region6: #{tpu_custom_call.1} parent=1 // pred_check
      _
    $region7: #{tpu_custom_call.1} parent=1 // pred_check_branch
      %30 = sbr.rel (0) target = $region9
    $region8: #{tpu_custom_call.1} parent=1 // pred_region
      %s31 = sadd.s32 0, 0
      %s32 = smul.u32 2, %s31
      %s34 = ssub.s32 256, 256
      %35 = vsyncadd [#allocation6], %s34
      %s36 = smul.addr %s32, 128
      %s37 = scalar_lea.hbm %s1, %s36
      %s38 = sshll.u32 [#allocation5], 4
      %s39 = int_to_ptr.vmem [resolvable:$true] %s38
      %44 = dma.hbm_to_vmem [thread:$0]  %s37, 256, %s39, [#allocation6], 128, 128, 8
    $region9: #{tpu_custom_call.1} parent=1 // pred_fallthru
      _
    // Predicated region
    $region10: #{tpu_custom_call.1} parent=1 // pred_check
      _
    $region11: #{tpu_custom_call.1} parent=1 // pred_check_branch
      %46 = sbr.rel (0) target = $region13
    $region12: #{tpu_custom_call.1} parent=1 // pred_region
      %47 = dma.done [#allocation3], 256
    $region13: #{tpu_custom_call.1} parent=1 // pred_fallthru
      _
    // Predicated region
    $region14: #{tpu_custom_call.1} parent=1 // pred_check
      _
    $region15: #{tpu_custom_call.1} parent=1 // pred_check_branch
      %49 = sbr.rel (0) target = $region17
    $region16: #{tpu_custom_call.1} parent=1 // pred_region
      %50 = dma.done [#allocation6], 256
    $region17: #{tpu_custom_call.1} parent=1 // pred_fallthru
      _
    %s51 = sadd.s32 0, 0
    %s52 = smul.u32 2, %s51
    %s53 = sadd.s32 0, 0
    %s54 = smul.u32 2, %s53
    %p55 = scmp.eq.s32.totalorder 0, 0
    // Predicated region
    $region18: #{tpu_custom_call.1} parent=1 // pred_check
      %p56 = pneg %p55
    $region19: #{tpu_custom_call.1} parent=1 // pred_check_branch
      %58 = sbr.rel (%p56) target = $region21
    $region20: #{tpu_custom_call.1} parent=1 // pred_region
      %59 = vst [vmem:[#allocation7] sm:$0xff] 0.0
      %60 = vst [vmem:[#allocation8] sm:$0xff] 0.0
    $region21: #{tpu_custom_call.1} parent=1 // pred_fallthru
      _
    %v61 = vld [vmem:[#allocation2] sm:$0xff]
    %v62 = vld [vmem:[#allocation2 + $0x8] sm:$0xff]
    %v63 = vld [vmem:[#allocation5] sm:$0xff]
    %v64 = vld [vmem:[#allocation5 + $0x8] sm:$0xff]
    %v65 = vsub.f32 %v61, %v63
    %v66 = vsub.f32 %v62, %v64
    %v67 = vld [vmem:[#allocation7] sm:$0xff]
    %v68 = vmul.f32 %v65, %v65
    %v69 = vmul.f32 %v66, %v66
    %v70 = vadd.f32 %v68, %v69
    %v71 = vadd.f32 %v67, %v70
    %72 = vst [vmem:[#allocation7] sm:$0xff] %v71
    %v73 = vld [vmem:[#allocation8] sm:$0xff]
    %v74 = vand.u32 2147483647, %v65
    %v75 = vand.u32 2147483647, %v66
    %v76 = vadd.f32 %v74, %v75
    %v77 = vadd.f32 %v73, %v76
    %78 = vst [vmem:[#allocation8] sm:$0xff] %v77
    // Predicated region
    $region22: #{tpu_custom_call.1} parent=1 // pred_check
      _
    $region23: #{tpu_custom_call.1} parent=1 // pred_check_branch
      %80 = sbr.rel (0) target = $region25
    $region24: #{tpu_custom_call.1} parent=1 // pred_region
      %s82 = ssub.s32 128, 128
      %83 = vsyncadd [#allocation4], %s82
      %s85 = sshll.u32 [#allocation7], 4
      %s86 = int_to_ptr.vmem [resolvable:$true] %s85
      %88 = dma.vmem_to_hbm [thread:$0]  %s86, 128, %s2, [#allocation4]
    $region25: #{tpu_custom_call.1} parent=1 // pred_fallthru
      _
    // Predicated region
    $region26: #{tpu_custom_call.1} parent=1 // pred_check
      _
    $region27: #{tpu_custom_call.1} parent=1 // pred_check_branch
      %90 = sbr.rel (0) target = $region29
    $region28: #{tpu_custom_call.1} parent=1 // pred_region
      %s92 = ssub.s32 128, 128
      %93 = vsyncadd [#allocation9], %s92
      %s95 = sshll.u32 [#allocation8], 4
      %s96 = int_to_ptr.vmem [resolvable:$true] %s95
      %98 = dma.vmem_to_hbm [thread:$0]  %s96, 128, %s3, [#allocation9]
    $region29: #{tpu_custom_call.1} parent=1 // pred_fallthru
      _
    // Predicated region
    $region30: #{tpu_custom_call.1} parent=1 // pred_check
      _
    $region31: #{tpu_custom_call.1} parent=1 // pred_check_branch
      %100 = sbr.rel (0) target = $region33
    $region32: #{tpu_custom_call.1} parent=1 // pred_region
      %101 = dma.done [#allocation4], 128
    $region33: #{tpu_custom_call.1} parent=1 // pred_fallthru
      _
    // Predicated region
    $region34: #{tpu_custom_call.1} parent=1 // pred_check
      _
    $region35: #{tpu_custom_call.1} parent=1 // pred_check_branch
      %103 = sbr.rel (0) target = $region37
    $region36: #{tpu_custom_call.1} parent=1 // pred_region
      %104 = dma.done [#allocation9], 128
    $region37: #{tpu_custom_call.1} parent=1 // pred_fallthru
      _
    %105 = vsyncpa [#allocation3], 1
    %106 = vsyncpa [#allocation6], 1
    %107 = vsyncpa [#allocation4], 1
    %108 = vsyncpa [#allocation9], 1

</llo_original>
